<compile_context>
chip_gen: v7x
topology: tpu7x:2x2x1
jax: 0.10.0
libtpu: 0.0.40
codegen_flags: <defaults>
</compile_context>

<pallas_src>
import functools
import math

import jax
import jax.numpy as jnp
from jax.experimental import pallas as pl
from jax.experimental.pallas import tpu as pltpu


def _round_up(x, m):
    return (x + m - 1) // m * m


def _group_linear_kernel(x1_ref, x2_ref, r_ref, w_ref, b_ref, o_ref, *, bs):
    # x1_ref, x2_ref : (l_tile, C)   current L-tile, current group chunk (C = GK*BS)
    # r_ref          : (C, K_chunk)  resident 0/1 expansion matrix (chunk-invariant)
    # w_ref          : (K_chunk, tn) weight slab for (chunk ci, O-tile oi)
    # b_ref          : (1, tn)       bias slab
    # o_ref          : (l_tile, tn)  f32 output block, resident across the chunk axis
    ci = pl.program_id(2)

    @pl.when(ci == 0)
    def _init():
        # Initialise the resident output block with the bias (acts as the
        # accumulator; no VMEM scratch needed for an f32 output).
        o_ref[...] = jnp.broadcast_to(b_ref[...], o_ref.shape)

    x1c = x1_ref[...]                                   # (l_tile, C) f32
    x2c = x2_ref[...]                                   # (l_tile, C) f32

    # Per-chunk feature layout:
    #   feat[:, i*C + lg*BS + j] = x1c[:, lg*BS + i] * x2c[:, lg*BS + j]
    # x1 factor: per-group column broadcast via one MXU matmul against the
    #            0/1 constant R (lane-dense).
    # x2 factor: the whole chunk tiled BS times along lanes (dense concat).
    x1e = jnp.dot(x1c, r_ref[...], preferred_element_type=jnp.float32)
    x2e = jnp.concatenate([x2c] * bs, axis=-1)
    feat = x1e * x2e                                    # dense f32 VPU multiply

    w = w_ref[...]
    if feat.dtype != w.dtype:
        feat = feat.astype(w.dtype)                     # bf16 cast right before the MXU

    # Main matmul: contraction depth K_chunk (>=128/256), f32 accumulation.
    o_ref[...] += jnp.dot(feat, w, preferred_element_type=jnp.float32)


def pack_group_linear(w_pt, bias, *, block_size, matmul_dtype=jnp.bfloat16,
                      target_k=None, tn=None):
    """Pack GroupLinear parameters once (cache the result across calls).

    w_pt : (O, H*block_size)   PyTorch nn.Linear weight layout
    bias : (O,)
    """
    w_pt = jnp.asarray(w_pt)
    bias = jnp.asarray(bias)
    O, K = w_pt.shape
    bs = block_size
    assert K % (bs * bs) == 0, "weight fan_in must be H*block_size"
    G = K // (bs * bs)
    H = G * bs

    mm_itemsize = jax.dtypes.canonicalize_dtype(matmul_dtype).itemsize
    if target_k is None:
        target_k = 256 if mm_itemsize <= 2 else 128     # MXU depth per pass

    # Groups fused per reduction step: enough for full MXU depth AND a
    # 128-lane-aligned input chunk so the (L, H) input blocks stay lane-dense.
    gk = max(1, -(-target_k // (bs * bs)))
    lane_gk = math.lcm(bs, 128) // bs
    gk = -(-gk // lane_gk) * lane_gk
    if gk >= G:
        gk = G                       # single chunk; input block covers full H
    g_pad = _round_up(G, gk)
    n_chunks = g_pad // gk
    C = gk * bs                      # input columns per chunk (mult of 128 or == H)
    kc = gk * bs * bs                # contraction depth per chunk

    o_pad = _round_up(O, 128)
    if tn is None:                   # lane-dense O tile that divides o_pad
        if o_pad <= 512:
            tn = o_pad
        elif o_pad % 512 == 0:
            tn = 512
        elif o_pad % 256 == 0:
            tn = 256
        else:
            tn = 128
    assert o_pad % tn == 0 and tn % 128 == 0

    # Weight: (O, H*BS) -> (n_chunks, kc, o_pad) with the per-chunk contraction
    # ordering p = i*(gk*BS) + lg*BS + j matching the in-kernel feature build.
    w = w_pt.T.reshape(G, bs, bs, O)                    # [g, i, j, o]
    if g_pad > G:
        w = jnp.pad(w, ((0, g_pad - G), (0, 0), (0, 0), (0, 0)))
    w = w.reshape(n_chunks, gk, bs, bs, O).transpose(0, 2, 1, 3, 4)
    w = w.reshape(n_chunks, kc, O)
    w = jnp.pad(w, ((0, 0), (0, 0), (0, o_pad - O))).astype(matmul_dtype)

    b = jnp.pad(bias.reshape(1, O), ((0, 0), (0, o_pad - O))).astype(jnp.float32)

    # Resident 0/1 expansion constant: x1e[:, p] = x1_chunk[:, src(p)].
    p = jnp.arange(kc)
    src = ((p % C) // bs) * bs + (p // C)
    r = (src[None, :] == jnp.arange(C)[:, None]).astype(jnp.float32)

    return dict(w=w, b=b, r=r, block_size=bs, G=G, H=H, O=O,
                n_chunks=n_chunks, C=C, kc=kc, o_pad=o_pad, tn=tn)


def group_linear(x1, x2, packed, *, l_tile=None):
    """GroupLinear forward: y = GroupFeature(x1, x2) @ W.T + b."""
    L, H = x1.shape
    assert x2.shape == (L, H)
    assert H == packed["H"], "input feature dim does not match packed weights"
    assert x1.dtype == jnp.float32 and x2.dtype == jnp.float32

    bs = packed["block_size"]
    C, kc = packed["C"], packed["kc"]
    n_chunks, o_pad, tn, O = (packed["n_chunks"], packed["o_pad"],
                              packed["tn"], packed["O"])
    h_pad = n_chunks * C

    if l_tile is None:
        l_tile = 256                 # v7x-friendly default; sweep per generation
    l_tile = _round_up(min(l_tile, _round_up(L, 8)), 8)
    l_pad = _round_up(L, l_tile)

    if (l_pad, h_pad) != (L, H):
        x1 = jnp.pad(x1, ((0, l_pad - L), (0, h_pad - H)))
        x2 = jnp.pad(x2, ((0, l_pad - L), (0, h_pad - H)))

    grid = (l_pad // l_tile, o_pad // tn, n_chunks)     # reduction (chunk) axis last

    w_item = packed["w"].dtype.itemsize
    steps = grid[0] * grid[1] * grid[2]
    cost = pl.CostEstimate(
        flops=int(steps * (2 * l_tile * C * kc          # x1 expansion matmul
                           + l_tile * kc                # feature multiply
                           + 2 * l_tile * kc * tn)),    # main matmul
        transcendentals=0,
        bytes_accessed=int(steps * (2 * l_tile * C * 4 + kc * tn * w_item)
                           + grid[0] * grid[1] * l_tile * tn * 4
                           + C * kc * 4 + o_pad * 4),
    )

    kernel = functools.partial(_group_linear_kernel, bs=bs)

    out = pl.pallas_call(
        kernel,
        out_shape=jax.ShapeDtypeStruct((l_pad, o_pad), jnp.float32),
        grid_spec=pltpu.PrefetchScalarGridSpec(
            num_scalar_prefetch=0,
            grid=grid,
            in_specs=[
                pl.BlockSpec((l_tile, C), lambda li, oi, ci: (li, ci)),     # x1
                pl.BlockSpec((l_tile, C), lambda li, oi, ci: (li, ci)),     # x2
                pl.BlockSpec((C, kc), lambda li, oi, ci: (0, 0)),           # R (resident)
                pl.BlockSpec((None, kc, tn), lambda li, oi, ci: (ci, 0, oi)),  # W
                pl.BlockSpec((1, tn), lambda li, oi, ci: (0, oi)),          # bias
            ],
            out_specs=pl.BlockSpec((l_tile, tn), lambda li, oi, ci: (li, oi)),
        ),
        compiler_params=pltpu.CompilerParams(
            dimension_semantics=("parallel", "parallel", "arbitrary"),
            vmem_limit_bytes=64 * 1024 * 1024),
        cost_estimate=cost,
    )(x1, x2, packed["r"], packed["w"], packed["b"])

    if (l_pad, o_pad) != (L, O):
        out = out[:L, :O]            # drop L / lane padding (plain JAX slice)
    return out


def _reference(x1, x2, w_pt, bias, block_size):
    """Pure-JAX reference of the PyTorch forward."""
    L, H = x1.shape
    G = H // block_size
    x1r = x1.reshape(L, G, block_size)
    x2r = x2.reshape(L, G, block_size)
    feat = (x1r[:, :, :, None] * x2r[:, :, None, :]).reshape(L, H * block_size)
    return jnp.matmul(feat, w_pt.T, precision=jax.lax.Precision.HIGHEST) + bias


if __name__ == "__main__":
    key = jax.random.PRNGKey(0)

    def make_case(k, L, H, BS, O):
        k1, k2, kw, kb = jax.random.split(k, 4)
        x1 = jax.random.normal(k1, (L, H), jnp.float32)
        x2 = jax.random.normal(k2, (L, H), jnp.float32)
        fan_in = H * BS
        bound = 1.0 / (fan_in ** 0.5)     # nn.Linear-style init
        w = jax.random.uniform(kw, (O, fan_in), jnp.float32, minval=-bound, maxval=bound)
        b = jax.random.uniform(kb, (O,), jnp.float32, minval=-bound, maxval=bound)
        return x1, x2, w, b

    k_tiny, k_big = jax.random.split(key)

    # Case 1: tiny shapes (single chunk, single O tile), f32 weights, tight check.
    x1, x2, w, b = make_case(k_tiny, L=16, H=8, BS=4, O=16)
    packed = pack_group_linear(w, b, block_size=4, matmul_dtype=jnp.float32)
    out = jax.block_until_ready(group_linear(x1, x2, packed, l_tile=8))
    ref = _reference(x1, x2, w, b, 4)
    assert out.shape == (16, 16)
    assert jnp.allclose(out, ref, atol=5e-4, rtol=5e-4), "f32 tiny case mismatch"

    # Case 2: multi-chunk reduction (n_chunks=2, K_chunk=512), O tiling (tn=128),
    # L padding (20 -> 24).  f32 weights first, then the recommended bf16 default.
    x1, x2, w, b = make_case(k_big, L=20, H=256, BS=4, O=192)
    ref = _reference(x1, x2, w, b, 4)

    packed_f32 = pack_group_linear(w, b, block_size=4, matmul_dtype=jnp.float32, tn=128)
    out_f32 = jax.block_until_ready(group_linear(x1, x2, packed_f32, l_tile=8))
    assert out_f32.shape == (20, 192)
    assert jnp.allclose(out_f32, ref, atol=5e-4, rtol=5e-4), "f32 case mismatch"

    packed_bf16 = pack_group_linear(w, b, block_size=4, tn=128)   # bf16 default
    out_bf16 = jax.block_until_ready(group_linear(x1, x2, packed_bf16, l_tile=8))
    assert jnp.allclose(out_bf16, ref, atol=5e-2, rtol=5e-2), "bf16 case mismatch"

    print("KERNEL_OK")
</pallas_src>

<mosaic_0001>
module attributes {stable_mosaic.version = 11 : i64} {
  func.func @_group_linear_kernel(%arg0: i32, %arg1: i32, %arg2: i32, %arg3: memref<8x8xf32, #tpu.memory_space<vmem>>, %arg4: memref<8x8xf32, #tpu.memory_space<vmem>>, %arg5: memref<8x32xf32, #tpu.memory_space<vmem>>, %arg6: memref<1x32x128xf32, #tpu.memory_space<vmem>>, %arg7: memref<1x128xf32, #tpu.memory_space<vmem>>, %arg8: memref<8x128xf32, #tpu.memory_space<vmem>>) attributes {dimension_semantics = [#tpu.dimension_semantics<parallel>, #tpu.dimension_semantics<parallel>, #tpu.dimension_semantics<arbitrary>], iteration_bounds = array<i64: 2, 1, 1>, scalar_prefetch = 0 : i64, scratch_operands = 0 : i64, tpu.core_type = #tpu.core_type<tc>, window_params = [{transform_indices = @transform_0, window_bounds = array<i64: 8, 8>}, {transform_indices = @transform_1, window_bounds = array<i64: 8, 8>}, {pipeline_mode = #tpu.pipeline_mode<synchronous>, transform_indices = @transform_2, window_bounds = array<i64: 8, 32>}, {transform_indices = @transform_3, window_bounds = array<i64: 1, 32, 128>}, {transform_indices = @transform_4, window_bounds = array<i64: 1, 128>}, {transform_indices = @transform_5, window_bounds = array<i64: 8, 128>}]} {
    %c0_i32 = arith.constant 0 : i32
    %0 = arith.cmpi eq, %arg2, %c0_i32 : i32
    %1 = arith.extui %0 : i1 to i32
    %c0_i32_0 = arith.constant 0 : i32
    %2 = arith.cmpi ne, %1, %c0_i32_0 : i32
    scf.if %2 {
      %c0_14 = arith.constant 0 : index
      %c0_15 = arith.constant 0 : index
      %15 = vector.load %arg7[%c0_14, %c0_15] : memref<1x128xf32, #tpu.memory_space<vmem>>, vector<1x128xf32>
      %16 = vector.shape_cast %15 : vector<1x128xf32> to vector<1x128xf32>
      %17 = vector.broadcast %16 : vector<1x128xf32> to vector<8x128xf32>
      %c0_16 = arith.constant 0 : index
      %c0_17 = arith.constant 0 : index
      %18 = vector.load %arg8[%c0_16, %c0_17] : memref<8x128xf32, #tpu.memory_space<vmem>>, vector<8x128xf32>
      tpu.vector_store %arg8[%c0_16, %c0_17], %17 {strides = array<i32>} : memref<8x128xf32, #tpu.memory_space<vmem>>, vector<8x128xf32>,
    } else {
    }
    %c0 = arith.constant 0 : index
    %c0_1 = arith.constant 0 : index
    %3 = vector.load %arg3[%c0, %c0_1] : memref<8x8xf32, #tpu.memory_space<vmem>>, vector<8x8xf32>
    %c0_2 = arith.constant 0 : index
    %c0_3 = arith.constant 0 : index
    %4 = vector.load %arg4[%c0_2, %c0_3] : memref<8x8xf32, #tpu.memory_space<vmem>>, vector<8x8xf32>
    %c0_4 = arith.constant 0 : index
    %c0_5 = arith.constant 0 : index
    %5 = vector.load %arg5[%c0_4, %c0_5] : memref<8x32xf32, #tpu.memory_space<vmem>>, vector<8x32xf32>
    %cst = arith.constant dense<0.000000e+00> : vector<8x32xf32>
    %6 = tpu.matmul %3, %5, %cst {dimension_numbers = #tpu.dot_dimension_numbers<[1], [0], [0], [1], [0, 0, 1, 1], [], []>} : vector<8x8xf32>, vector<8x32xf32>, vector<8x32xf32> -> vector<8x32xf32>
    %7 = tpu.concatenate %4, %4, %4, %4 in 1 : vector<8x8xf32>, vector<8x8xf32>, vector<8x8xf32>, vector<8x8xf32> -> vector<8x32xf32>
    %8 = arith.mulf %6, %7 : vector<8x32xf32>
    %c0_6 = arith.constant 0 : index
    %c0_7 = arith.constant 0 : index
    %c0_8 = arith.constant 0 : index
    %9 = vector.load %arg6[%c0_6, %c0_7, %c0_8] : memref<1x32x128xf32, #tpu.memory_space<vmem>>, vector<1x32x128xf32>
    %10 = vector.shape_cast %9 : vector<1x32x128xf32> to vector<32x128xf32>
    %c0_9 = arith.constant 0 : index
    %c0_10 = arith.constant 0 : index
    %11 = vector.load %arg8[%c0_9, %c0_10] : memref<8x128xf32, #tpu.memory_space<vmem>>, vector<8x128xf32>
    %cst_11 = arith.constant dense<0.000000e+00> : vector<8x128xf32>
    %12 = tpu.matmul %8, %10, %cst_11 {dimension_numbers = #tpu.dot_dimension_numbers<[1], [0], [0], [1], [0, 0, 1, 1], [], []>} : vector<8x32xf32>, vector<32x128xf32>, vector<8x128xf32> -> vector<8x128xf32>
    %13 = arith.addf %11, %12 : vector<8x128xf32>
    %c0_12 = arith.constant 0 : index
    %c0_13 = arith.constant 0 : index
    %14 = vector.load %arg8[%c0_12, %c0_13] : memref<8x128xf32, #tpu.memory_space<vmem>>, vector<8x128xf32>
    tpu.vector_store %arg8[%c0_12, %c0_13], %13 {strides = array<i32>} : memref<8x128xf32, #tpu.memory_space<vmem>>, vector<8x128xf32>,
    return
  }
  func.func @transform_0(%arg0: i32, %arg1: i32, %arg2: i32) -> (i32, i32) {
    %c0_i32 = arith.constant 0 : i32
    return %arg0, %arg2 : i32, i32
  }
  func.func @transform_1(%arg0: i32, %arg1: i32, %arg2: i32) -> (i32, i32) {
    %c0_i32 = arith.constant 0 : i32
    return %arg0, %arg2 : i32, i32
  }
  func.func @transform_2(%arg0: i32, %arg1: i32, %arg2: i32) -> (i32, i32) {
    %c0_i32 = arith.constant 0 : i32
    %c0_i32_0 = arith.constant 0 : i32
    %c0_i32_1 = arith.constant 0 : i32
    return %c0_i32, %c0_i32_0 : i32, i32
  }
  func.func @transform_3(%arg0: i32, %arg1: i32, %arg2: i32) -> (i32, i32, i32) {
    %c0_i32 = arith.constant 0 : i32
    %c0_i32_0 = arith.constant 0 : i32
    return %arg2, %c0_i32, %arg1 : i32, i32, i32
  }
  func.func @transform_4(%arg0: i32, %arg1: i32, %arg2: i32) -> (i32, i32) {
    %c0_i32 = arith.constant 0 : i32
    %c0_i32_0 = arith.constant 0 : i32
    return %c0_i32, %arg1 : i32, i32
  }
  func.func @transform_5(%arg0: i32, %arg1: i32, %arg2: i32) -> (i32, i32) {
    %c0_i32 = arith.constant 0 : i32
    return %arg0, %arg1 : i32, i32
  }
}

</mosaic_0001>

<llo_original>
// kernel: tpu_custom_call.1
$region0: #{tpu_custom_call.1}
  #allocation0 [shape = 'u32[]', space=smem, size = 0x4, offset = 0x4, fixed_abs, tag = 'smem constant byte address 0x4 - core index']
  #allocation1 [shape = 'u32[144,128]{1,0:T(1,128)}', space=vmem, size = 0x12000, scoped, tag = 'internal scratch']
  %s0 = inlined_call_operand.hbm [shape: f32[16,8], index: 0, kind: input, shape index: {}]
  %s1 = inlined_call_operand.hbm [shape: f32[16,8], index: 1, kind: input, shape index: {}]
  %s2 = inlined_call_operand.hbm [shape: f32[8,32], index: 2, kind: input, shape index: {}]
  %s3 = inlined_call_operand.hbm [shape: f32[1,32,128], index: 3, kind: input, shape index: {}]
  %s4 = inlined_call_operand.hbm [shape: f32[1,128], index: 4, kind: input, shape index: {}]
  %s5 = inlined_call_operand.hbm [shape: f32[16,128], index: 5, kind: output, shape index: {}]
  %s6 = sld [smem:[#allocation0]]
  $region77: #{tpu_custom_call.1} parent=0
    _
  %s8 = ssub.s32 1, %s6
  %s9 = scalar_select 0, %s8, %s6
  $region1: #{tpu_custom_call.1} parent=0
    #allocation2 [shape = 'u8[8192]{0}', space=vmem, size = 0x2000, scoped, tag = 'input window, operand 0']
    #allocation3 [shape = 's32[2]{0}', space=sflag, size = 0x8, scoped, tag = 'scoped memory for tpu_custom_call.1']
    #allocation4 [shape = 's32[2]{0}', space=sflag, size = 0x8, scoped, tag = 'scoped memory for tpu_custom_call.1']
    #allocation5 [shape = 'u8[8192]{0}', space=vmem, size = 0x2000, scoped, tag = 'input window, operand 1']
    #allocation6 [shape = 's32[2]{0}', space=sflag, size = 0x8, scoped, tag = 'scoped memory for tpu_custom_call.1']
    #allocation7 [shape = 'u8[4096]{0}', space=vmem, size = 0x1000, scoped, tag = 'input window, operand 2, single buffered']
    #allocation8 [shape = 'u8[16384]{0}', space=vmem, size = 0x4000, scoped, tag = 'input window, operand 3, single buffered']
    #allocation9 [shape = 's32[1]{0}', space=sflag, size = 0x4, scoped, tag = 'scoped memory for tpu_custom_call.1']
    #allocation10 [shape = 'u8[512]{0}', space=vmem, size = 0x400, scoped, tag = 'input window, operand 4, single buffered']
    #allocation11 [shape = 'u8[8192]{0}', space=vmem, size = 0x2000, scoped, tag = 'output window, operand 0']
    %10 = vsyncpa [#allocation3], 0
    %s11 = scalar_lea.sflag [#allocation3], 1
    %12 = vsyncpa %s11, 0
    %13 = vsyncpa [#allocation6], 0
    %s14 = scalar_lea.sflag [#allocation6], 1
    %15 = vsyncpa %s14, 0
    %16 = vsyncpa [#allocation9], 0
    %17 = vsyncpa [#allocation4], 0
    %s18 = scalar_lea.sflag [#allocation4], 1
    %19 = vsyncpa %s18, 0
    loop: start=0, step=1, limit=4
    $region2: #{tpu_custom_call.1} parent=1 // loop_pre_header
      _
    $region3: #{tpu_custom_call.1} parent=1 // loop_header
      %s21 = sphi 0, %s25
      %p22 = scmp.ge.s32.totalorder %s21, 4
      %s28 = sphi 0, %s47
      %s29 = sphi 0, %s43
      %s30 = sphi 0, %s39
      %s31 = sphi 0, %s28
      %s32 = sphi 0, %s29
      %s33 = sphi 0, %s30
      %s34 = sphi 0, %s31
      %s35 = sphi 0, %s32
      %s36 = sphi 0, %s33
      %s52 = sphi 0, %s54
      %s55 = sphi 0, %s52
      %s56 = sphi 0, %s55
      %s72 = sphi 0, %s56
      %s80 = sphi 0, %s82
      %s83 = sphi 0, %s80
      %s84 = sphi 0, %s83
      %s100 = sphi 0, %s84
      %s104 = sphi 0, %s104
      %s106 = sphi 0, %s104
      %s107 = sphi 0, %s106
      %s121 = sphi 0, %s107
      %s129 = sphi 0, %s131
      %s132 = sphi 0, %s129
      %s133 = sphi 0, %s132
      %s149 = sphi 0, %s133
      %s155 = sphi 0, %s157
      %s158 = sphi 0, %s155
      %s159 = sphi 0, %s158
      %s175 = sphi 0, %s159
      %s183 = sphi 0, %s185
      %s186 = sphi 0, %s183
      %s187 = sphi 0, %s186
      %s203 = sphi 0, %s187
    $region4: #{tpu_custom_call.1} parent=1 // loop_header_branch
      %24 = sbr.rel (%p22) target = $region8
    $region5: #{tpu_custom_call.1} parent=1 // loop_body
      %s26 = ssub.s32 %s21, 1
      %s27 = ssub.s32 %s21, 2
      %s37 = sadd.s32 1, %s30
      %p38 = scmp.ge.s32.totalorder %s37, 1
      %s39 = scalar_select %p38, 0, %s37
      %s40 = sadd.s32 1, %s29
      %s41 = scalar_select %p38, %s40, %s29
      %p42 = scmp.ge.s32.totalorder %s41, 1
      %s43 = scalar_select %p42, 0, %s41
      %s44 = sadd.s32 1, %s28
      %s45 = scalar_select %p42, %s44, %s28
      %p46 = scmp.ge.s32.totalorder %s45, 2
      %s47 = scalar_select %p46, 0, %s45
      %s48 = ssub.s32 %s28, %s47
      %s49 = ssub.s32 %s30, %s39
      %s50 = sor.u32 %s48, %s49
      %p51 = scmp.eq.s32.totalorder %s50, 0
      %s53 = sadd.s32 %s52, 1
      %s54 = scalar_select %p51, %s52, %s53
      %p57 = pneg %p51
      %p58 = scmp.eq.s32.totalorder %s21, 1
      %p59 = por %p57, %p58
      %p60 = scmp.ne.s32.totalorder %s52, %s55
      %p61 = scmp.eq.s32.totalorder %s21, 0
      %p62 = por %p60, %p61
      %p63 = scmp.ne.s32.totalorder %s52, %s55
      %p64 = scmp.eq.s32.totalorder %s26, 1
      %p65 = por %p63, %p64
      %p66 = scmp.ne.s32.totalorder %s55, %s56
      %p67 = scmp.eq.s32.totalorder %s26, 0
      %p68 = por %p66, %p67
      %p69 = scmp.ne.s32.totalorder %s55, %s56
      %p70 = scmp.eq.s32.totalorder %s27, 1
      %p71 = por %p69, %p70
      %p73 = scmp.ne.s32.totalorder %s56, %s72
      %p74 = scmp.eq.s32.totalorder %s27, 0
      %p75 = por %p73, %p74
      %s76 = ssub.s32 %s28, %s47
      %s77 = ssub.s32 %s30, %s39
      %s78 = sor.u32 %s76, %s77
      %p79 = scmp.eq.s32.totalorder %s78, 0
      %s81 = sadd.s32 %s80, 1
      %s82 = scalar_select %p79, %s80, %s81
      %p85 = pneg %p79
      %p86 = scmp.eq.s32.totalorder %s21, 1
      %p87 = por %p85, %p86
      %p88 = scmp.ne.s32.totalorder %s80, %s83
      %p89 = scmp.eq.s32.totalorder %s21, 0
      %p90 = por %p88, %p89
      %p91 = scmp.ne.s32.totalorder %s80, %s83
      %p92 = scmp.eq.s32.totalorder %s26, 1
      %p93 = por %p91, %p92
      %p94 = scmp.ne.s32.totalorder %s83, %s84
      %p95 = scmp.eq.s32.totalorder %s26, 0
      %p96 = por %p94, %p95
      %p97 = scmp.ne.s32.totalorder %s83, %s84
      %p98 = scmp.eq.s32.totalorder %s27, 1
      %p99 = por %p97, %p98
      %p101 = scmp.ne.s32.totalorder %s84, %s100
      %p102 = scmp.eq.s32.totalorder %s27, 0
      %p103 = por %p101, %p102
      %s105 = sadd.s32 %s104, 1
      %p108 = scmp.eq.s32.totalorder %s21, 1
      %p109 = scmp.ne.s32.totalorder %s104, %s106
      %p110 = scmp.eq.s32.totalorder %s21, 0
      %p111 = por %p109, %p110
      %p112 = scmp.ne.s32.totalorder %s104, %s106
      %p113 = scmp.eq.s32.totalorder %s26, 1
      %p114 = por %p112, %p113
      %p115 = scmp.ne.s32.totalorder %s106, %s107
      %p116 = scmp.eq.s32.totalorder %s26, 0
      %p117 = por %p115, %p116
      %p118 = scmp.ne.s32.totalorder %s106, %s107
      %p119 = scmp.eq.s32.totalorder %s27, 1
      %p120 = por %p118, %p119
      %p122 = scmp.ne.s32.totalorder %s107, %s121
      %p123 = scmp.eq.s32.totalorder %s27, 0
      %p124 = por %p122, %p123
      %s125 = ssub.s32 %s30, %s39
      %s126 = ssub.s32 %s29, %s43
      %s127 = sor.u32 %s125, %s126
      %p128 = scmp.eq.s32.totalorder %s127, 0
      %s130 = sadd.s32 %s129, 1
      %s131 = scalar_select %p128, %s129, %s130
      %p134 = pneg %p128
      %p135 = scmp.eq.s32.totalorder %s21, 1
      %p136 = por %p134, %p135
      %p137 = scmp.ne.s32.totalorder %s129, %s132
      %p138 = scmp.eq.s32.totalorder %s21, 0
      %p139 = por %p137, %p138
      %p140 = scmp.ne.s32.totalorder %s129, %s132
      %p141 = scmp.eq.s32.totalorder %s26, 1
      %p142 = por %p140, %p141
      %p143 = scmp.ne.s32.totalorder %s132, %s133
      %p144 = scmp.eq.s32.totalorder %s26, 0
      %p145 = por %p143, %p144
      %p146 = scmp.ne.s32.totalorder %s132, %s133
      %p147 = scmp.eq.s32.totalorder %s27, 1
      %p148 = por %p146, %p147
      %p150 = scmp.ne.s32.totalorder %s133, %s149
      %p151 = scmp.eq.s32.totalorder %s27, 0
      %p152 = por %p150, %p151
      %s153 = ssub.s32 %s29, %s43
      %p154 = scmp.eq.s32.totalorder %s153, 0
      %s156 = sadd.s32 %s155, 1
      %s157 = scalar_select %p154, %s155, %s156
      %p160 = pneg %p154
      %p161 = scmp.eq.s32.totalorder %s21, 1
      %p162 = por %p160, %p161
      %p163 = scmp.ne.s32.totalorder %s155, %s158
      %p164 = scmp.eq.s32.totalorder %s21, 0
      %p165 = por %p163, %p164
      %p166 = scmp.ne.s32.totalorder %s155, %s158
      %p167 = scmp.eq.s32.totalorder %s26, 1
      %p168 = por %p166, %p167
      %p169 = scmp.ne.s32.totalorder %s158, %s159
      %p170 = scmp.eq.s32.totalorder %s26, 0
      %p171 = por %p169, %p170
      %p172 = scmp.ne.s32.totalorder %s158, %s159
      %p173 = scmp.eq.s32.totalorder %s27, 1
      %p174 = por %p172, %p173
      %p176 = scmp.ne.s32.totalorder %s159, %s175
      %p177 = scmp.eq.s32.totalorder %s27, 0
      %p178 = por %p176, %p177
      %s179 = ssub.s32 %s28, %s47
      %s180 = ssub.s32 %s29, %s43
      %s181 = sor.u32 %s179, %s180
      %p182 = scmp.eq.s32.totalorder %s181, 0
      %s184 = sadd.s32 %s183, 1
      %s185 = scalar_select %p182, %s183, %s184
      %p188 = pneg %p182
      %p189 = scmp.eq.s32.totalorder %s21, 1
      %p190 = por %p188, %p189
      %p191 = scmp.ne.s32.totalorder %s183, %s186
      %p192 = scmp.eq.s32.totalorder %s21, 0
      %p193 = por %p191, %p192
      %p194 = scmp.ne.s32.totalorder %s183, %s186
      %p195 = scmp.eq.s32.totalorder %s26, 1
      %p196 = por %p194, %p195
      %p197 = scmp.ne.s32.totalorder %s186, %s187
      %p198 = scmp.eq.s32.totalorder %s26, 0
      %p199 = por %p197, %p198
      %p200 = scmp.ne.s32.totalorder %s186, %s187
      %p201 = scmp.eq.s32.totalorder %s27, 1
      %p202 = por %p200, %p201
      %p204 = scmp.ne.s32.totalorder %s187, %s203
      %p205 = scmp.eq.s32.totalorder %s27, 0
      %p206 = por %p204, %p205
      %p207 = scmp.le.s32.totalorder 1, %s21
      %p208 = scmp.lt.s32.totalorder %s21, 3
      %p209 = pnand %p207, %p208
      %p210 = pneg %p209
      // Predicated region
      $region9: #{tpu_custom_call.1} parent=5 // pred_check
        _
      $region10: #{tpu_custom_call.1} parent=5 // pred_check_branch
        %212 = sbr.rel (%p209) target = $region12
      $region11: #{tpu_custom_call.1} parent=5 // pred_region
        %s213 = ssub.s32 %s21, 1
        // Predicated region
        $region13: #{tpu_custom_call.1} parent=11 // pred_check
          %p214 = pneg %p117
        $region14: #{tpu_custom_call.1} parent=11 // pred_check_branch
          %216 = sbr.rel (%p214) target = $region16
        $region15: #{tpu_custom_call.1} parent=11 // pred_region
          %s218 = ssub.s32 128, 128
          %219 = vsyncadd [#allocation6], %s218
          %s221 = sshll.u32 [#allocation7], 4
          %s222 = int_to_ptr.vmem [resolvable:$true] %s221
          %224 = dma.hbm_to_vmem [thread:$0]  %s2, 128, %s222, [#allocation6]
        $region16: #{tpu_custom_call.1} parent=11 // pred_fallthru
          _
        // Predicated region
        $region17: #{tpu_custom_call.1} parent=11 // pred_check
          %p225 = pneg %p145
        $region18: #{tpu_custom_call.1} parent=11 // pred_check_branch
          %227 = sbr.rel (%p225) target = $region20
        $region19: #{tpu_custom_call.1} parent=11 // pred_region
          %s229 = ssub.s32 512, 512
          %230 = vsyncadd [#allocation9], %s229
          %s231 = smul.addr %s33, 4
          %s232 = sadd.s32 %s32, %s231
          %s233 = smul.addr %s232, 128
          %s234 = scalar_lea.hbm %s3, %s233
          %s235 = sshll.u32 [#allocation8], 4
          %s236 = int_to_ptr.vmem [resolvable:$true] %s235
          %241 = dma.hbm_to_vmem [thread:$0]  %s234, 512, %s236, [#allocation9], 128, 128, 8
        $region20: #{tpu_custom_call.1} parent=11 // pred_fallthru
          _
        // Predicated region
        $region21: #{tpu_custom_call.1} parent=11 // pred_check
          %p242 = pneg %p171
        $region22: #{tpu_custom_call.1} parent=11 // pred_check_branch
          %244 = sbr.rel (%p242) target = $region24
        $region23: #{tpu_custom_call.1} parent=11 // pred_region
          %s246 = ssub.s32 16, 16
          %247 = vsyncadd [#allocation9], %s246
          %s248 = smul.addr %s32, 16
          %s249 = scalar_lea.hbm %s4, %s248
          %s251 = sshll.u32 [#allocation10], 4
          %s252 = int_to_ptr.vmem [resolvable:$true] %s251
          %254 = dma.hbm_to_vmem [thread:$0]  %s249, 16, %s252, [#allocation9]
        $region24: #{tpu_custom_call.1} parent=11 // pred_fallthru
          _
      $region12: #{tpu_custom_call.1} parent=5 // pred_fallthru
        _
      %p255 = scmp.lt.s32.totalorder %s21, 2
      // Predicated region
      $region25: #{tpu_custom_call.1} parent=5 // pred_check
        %p256 = pneg %p255
      $region26: #{tpu_custom_call.1} parent=5 // pred_check_branch
        %258 = sbr.rel (%p256) target = $region28
      $region27: #{tpu_custom_call.1} parent=5 // pred_region
        // Predicated region
        $region29: #{tpu_custom_call.1} parent=27 // pred_check
          %p259 = pneg %p62
        $region30: #{tpu_custom_call.1} parent=27 // pred_check_branch
          %261 = sbr.rel (%p259) target = $region32
        $region31: #{tpu_custom_call.1} parent=27 // pred_region
          %s262 = sand.u32 %s52, 1
          %s263 = scalar_lea.sflag [#allocation3], %s262
          %s264 = sand.u32 %s52, 1
          %s265 = smul.addr %s264, 8
          %s266 = scalar_lea.vmem [#allocation2], %s265
          %s268 = ssub.s32 128, 128
          %269 = vsyncadd %s263, %s268
          %s270 = sadd.s32 %s30, %s28
          %s271 = smul.addr %s270, 128
          %s272 = scalar_lea.hbm %s0, %s271
          %s274 = sshll.u32 %s266, 4
          %s275 = int_to_ptr.vmem [resolvable:$true] %s274
          %277 = dma.hbm_to_vmem [thread:$0]  %s272, 128, %s275, %s263
        $region32: #{tpu_custom_call.1} parent=27 // pred_fallthru
          _
        // Predicated region
        $region33: #{tpu_custom_call.1} parent=27 // pred_check
          %p278 = pneg %p90
        $region34: #{tpu_custom_call.1} parent=27 // pred_check_branch
          %280 = sbr.rel (%p278) target = $region36
        $region35: #{tpu_custom_call.1} parent=27 // pred_region
          %s281 = sand.u32 %s21, 1
          %s282 = scalar_lea.sflag [#allocation6], %s281
          %s283 = sand.u32 %s80, 1
          %s284 = smul.addr %s283, 8
          %s285 = scalar_lea.vmem [#allocation5], %s284
          %s287 = ssub.s32 128, 128
          %288 = vsyncadd %s282, %s287
          %s289 = sadd.s32 %s30, %s28
          %s290 = smul.addr %s289, 128
          %s291 = scalar_lea.hbm %s1, %s290
          %s293 = sshll.u32 %s285, 4
          %s294 = int_to_ptr.vmem [resolvable:$true] %s293
          %296 = dma.hbm_to_vmem [thread:$0]  %s291, 128, %s294, %s282
        $region36: #{tpu_custom_call.1} parent=27 // pred_fallthru
          _
      $region28: #{tpu_custom_call.1} parent=5 // pred_fallthru
        _
      %p297 = scmp.le.s32.totalorder 1, %s21
      %p298 = scmp.lt.s32.totalorder %s21, 3
      %p299 = pnand %p297, %p298
      %p300 = pneg %p299
      // Predicated region
      $region37: #{tpu_custom_call.1} parent=5 // pred_check
        _
      $region38: #{tpu_custom_call.1} parent=5 // pred_check_branch
        %302 = sbr.rel (%p299) target = $region40
      $region39: #{tpu_custom_call.1} parent=5 // pred_region
        %s303 = ssub.s32 %s21, 1
        %s304 = sand.u32 %s55, 1
        %s305 = scalar_lea.sflag [#allocation3], %s304
        %s306 = sand.u32 %s55, 1
        %s307 = smul.addr %s306, 8
        %s308 = scalar_lea.vmem [#allocation2], %s307
        // Predicated region
        $region41: #{tpu_custom_call.1} parent=39 // pred_check
          %p309 = pneg %p68
        $region42: #{tpu_custom_call.1} parent=39 // pred_check_branch
          %311 = sbr.rel (%p309) target = $region44
        $region43: #{tpu_custom_call.1} parent=39 // pred_region
          %312 = dma.done %s305, 128
        $region44: #{tpu_custom_call.1} parent=39 // pred_fallthru
          _
        %s313 = sand.u32 %s26, 1
        %s314 = scalar_lea.sflag [#allocation6], %s313
        %s315 = sand.u32 %s83, 1
        %s316 = smul.addr %s315, 8
        %s317 = scalar_lea.vmem [#allocation5], %s316
        // Predicated region
        $region45: #{tpu_custom_call.1} parent=39 // pred_check
          %p318 = pneg %p96
        $region46: #{tpu_custom_call.1} parent=39 // pred_check_branch
          %320 = sbr.rel (%p318) target = $region48
        $region47: #{tpu_custom_call.1} parent=39 // pred_region
          %321 = dma.done %s314, 128
        $region48: #{tpu_custom_call.1} parent=39 // pred_fallthru
          _
        // Predicated region
        $region49: #{tpu_custom_call.1} parent=39 // pred_check
          %p322 = pneg %p117
        $region50: #{tpu_custom_call.1} parent=39 // pred_check_branch
          %324 = sbr.rel (%p322) target = $region52
        $region51: #{tpu_custom_call.1} parent=39 // pred_region
          %325 = dma.done [#allocation6], 128
        $region52: #{tpu_custom_call.1} parent=39 // pred_fallthru
          _
        // Predicated region
        $region53: #{tpu_custom_call.1} parent=39 // pred_check
          %p326 = pneg %p145
        $region54: #{tpu_custom_call.1} parent=39 // pred_check_branch
          %328 = sbr.rel (%p326) target = $region56
        $region55: #{tpu_custom_call.1} parent=39 // pred_region
          %329 = dma.done [#allocation9], 512
        $region56: #{tpu_custom_call.1} parent=39 // pred_fallthru
          _
        // Predicated region
        $region57: #{tpu_custom_call.1} parent=39 // pred_check
          %p330 = pneg %p171
        $region58: #{tpu_custom_call.1} parent=39 // pred_check_branch
          %332 = sbr.rel (%p330) target = $region60
        $region59: #{tpu_custom_call.1} parent=39 // pred_region
          %333 = dma.done [#allocation9], 16
        $region60: #{tpu_custom_call.1} parent=39 // pred_fallthru
          _
        %s334 = sand.u32 %s55, 1
        %s335 = scalar_lea.sflag [#allocation3], %s334
        %s336 = sand.u32 %s55, 1
        %s337 = smul.addr %s336, 8
        %s338 = scalar_lea.vmem [#allocation2], %s337
        %p339 = pneg %p68
        %p340 = pneg %p65
        %s341 = sand.u32 %s26, 1
        %s342 = scalar_lea.sflag [#allocation6], %s341
        %s343 = sand.u32 %s83, 1
        %s344 = smul.addr %s343, 8
        %s345 = scalar_lea.vmem [#allocation5], %s344
        %p346 = pneg %p96
        %p347 = pneg %p93
        %p348 = pneg %p117
        %p349 = pneg %p114
        %p350 = pneg %p145
        %p351 = pneg %p142
        %p352 = pneg %p171
        %p353 = pneg %p168
        %p354 = pneg %p199
        %p355 = pneg %p196
        %s356 = sand.u32 %s186, 1
        %s357 = scalar_lea.sflag [#allocation4], %s356
        %s358 = sand.u32 %s186, 1
        %s359 = smul.addr %s358, 8
        %s360 = scalar_lea.vmem [#allocation11], %s359
        %p361 = scmp.eq.s32.totalorder %s33, 0
        // Predicated region
        $region61: #{tpu_custom_call.1} parent=39 // pred_check
          %p362 = pneg %p361
        $region62: #{tpu_custom_call.1} parent=39 // pred_check_branch
          %364 = sbr.rel (%p362) target = $region64
        $region63: #{tpu_custom_call.1} parent=39 // pred_region
          %v365 = vld [vmem:[#allocation10] sm:$0x1]
          %v367 = vlaneseq
          %v368 = vshrl.u32 %v367, 7
          %v369 = vsub.s32 0, %v368
          %v370 = vrot.slane %v365, %v369
          %372 = vst [vmem:[%s360] sm:$0xff] %v370
        $region64: #{tpu_custom_call.1} parent=39 // pred_fallthru
          _
        %v373 = vld [vmem:[%s308] sm:$0xff]
        %v374 = vld [vmem:[%s317] sm:$0xff]
        %v375 = vld [vmem:[#allocation7] sm:$0xff]
        %vm376 = vcmask 64512
        %v378 = vsel %vm376, %v373, 0
        %380 = vmatprep.subr.mxu0 0.0
        %381 = vmatpush1.msra.mxu0 %v375
        %382 = vmatprep.subr.mxu0 0.0
        %383 = vmatpush1.msra.mxu0 0.0
        %384 = vmatprep.subr.mxu0 0.0
        %385 = vmatpush1.msra.mxu0 0.0
        %386 = vmatprep.subr.mxu0 0.0
        %387 = vmatpush1.msra.mxu0 0.0
        %388 = vmatprep.subr.mxu0 0.0
        %389 = vmatpush1.msra.mxu0 0.0
        %390 = vmatprep.subr.mxu0 0.0
        %391 = vmatpush1.msra.mxu0 0.0
        %392 = vmatprep.subr.mxu0 0.0
        %393 = vmatpush1.msra.mxu0 0.0
        %394 = vmatprep.subr.mxu0 0.0
        %395 = vmatpush1.msra.mxu0 0.0
        %396 = vmatprep.subr.mxu0 0.0
        %397 = vmatpush1.msra.mxu0 0.0
        %398 = vmatprep.subr.mxu0 0.0
        %399 = vmatpush1.msra.mxu0 0.0
        %400 = vmatprep.subr.mxu0 0.0
        %401 = vmatpush1.msra.mxu0 0.0
        %402 = vmatprep.subr.mxu0 0.0
        %403 = vmatpush1.msra.mxu0 0.0
        %404 = vmatprep.subr.mxu0 0.0
        %405 = vmatpush1.msra.mxu0 0.0
        %406 = vmatprep.subr.mxu0 0.0
        %407 = vmatpush1.msra.mxu0 0.0
        %408 = vmatprep.subr.mxu0 0.0
        %409 = vmatpush1.msra.mxu0 0.0
        %410 = vmatprep.subr.mxu0 0.0
        %411 = vmatpush1.msra.mxu0 0.0
        %412 = vmatprep.subr.mxu0 0.0
        %413 = vmatpush1.msra.mxu0 0.0
        %414 = vmatprep.subr.mxu0 0.0
        %415 = vmatpush1.msra.mxu0 0.0
        %416 = vmatprep.subr.mxu0 0.0
        %417 = vmatpush1.msra.mxu0 0.0
        %418 = vmatprep.subr.mxu0 0.0
        %419 = vmatpush1.msra.mxu0 0.0
        %420 = vmatprep.subr.mxu0 0.0
        %421 = vmatpush1.msra.mxu0 0.0
        %422 = vmatprep.subr.mxu0 0.0
        %423 = vmatpush1.msra.mxu0 0.0
        %424 = vmatprep.subr.mxu0 0.0
        %425 = vmatpush1.msra.mxu0 0.0
        %426 = vmatprep.subr.mxu0 0.0
        %427 = vmatpush1.msra.mxu0 0.0
        %428 = vmatprep.subr.mxu0 0.0
        %429 = vmatpush1.msra.mxu0 0.0
        %430 = vmatprep.subr.mxu0 0.0
        %431 = vmatpush1.msra.mxu0 0.0
        %432 = vmatprep.subr.mxu0 0.0
        %433 = vmatpush1.msra.mxu0 0.0
        %434 = vmatprep.subr.mxu0 0.0
        %435 = vmatpush1.msra.mxu0 0.0
        %436 = vmatprep.subr.mxu0 0.0
        %437 = vmatpush1.msra.mxu0 0.0
        %438 = vmatprep.subr.mxu0 0.0
        %439 = vmatpush1.msra.mxu0 0.0
        %440 = vmatprep.subr.mxu0 0.0
        %441 = vmatpush1.msra.mxu0 0.0
        %442 = vmatprep.subr.mxu0 0.0
        %443 = vmatpush1.msra.mxu0 0.0
        %444 = vmatprep.mubr.f32.mxu0 0.0
        %445 = vmatmul.mubr.f32.gmra.mrb[0].mxu0 %v378
        %v446 = vpop.f32.mrb[0].mxu0
        %v447 = vadd.f32 0.0, %v446
        %v448 = vpop.f32.mrb[0].mxu0
        %449 = vdwg.mxu0
        %451 = vrot.lane.b32.xlu0 %v374, 8
        %v452 = vpop.permute.xlu0 %451
        %454 = vrot.lane.b32.xlu0 %v374, 16
        %v455 = vpop.permute.xlu0 %454
        %457 = vrot.lane.b32.xlu0 %v374, 24
        %v458 = vpop.permute.xlu0 %457
        %v460 = vsel %vm376, %v374, %v452
        %vm461 = vcmask 130048
        %v462 = vsel %vm461, %v460, %v455
        %vm463 = vcmask 195584
        %v464 = vsel %vm463, %v462, %v458
        %v465 = vmul.f32 %v447, %v464
        %v466 = vld [vmem:[#allocation8] sm:$0xff]
        %v467 = vld [vmem:[#allocation8 + $0x8] sm:$0xff]
        %v468 = vld [vmem:[#allocation8 + $0x10] sm:$0xff]
        %v469 = vld [vmem:[#allocation8 + $0x18] sm:$0xff]
        %v470 = vld [vmem:[%s360] sm:$0xff]
        %vm471 = vcmask 261120
        %v473 = vsel %vm471, %v465, 0
        %475 = vmatprep.subr.mxu0 0.0
        %476 = vmatpush1.msra.mxu0 %v466
        %477 = vmatprep.subr.mxu0 0.0
        %478 = vmatpush1.msra.mxu0 %v467
        %479 = vmatprep.subr.mxu0 0.0
        %480 = vmatpush1.msra.mxu0 %v468
        %481 = vmatprep.subr.mxu0 0.0
        %482 = vmatpush1.msra.mxu0 %v469
        %483 = vmatprep.subr.mxu0 0.0
        %484 = vmatpush1.msra.mxu0 0.0
        %485 = vmatprep.subr.mxu0 0.0
        %486 = vmatpush1.msra.mxu0 0.0
        %487 = vmatprep.subr.mxu0 0.0
        %488 = vmatpush1.msra.mxu0 0.0
        %489 = vmatprep.subr.mxu0 0.0
        %490 = vmatpush1.msra.mxu0 0.0
        %491 = vmatprep.subr.mxu0 0.0
        %492 = vmatpush1.msra.mxu0 0.0
        %493 = vmatprep.subr.mxu0 0.0
        %494 = vmatpush1.msra.mxu0 0.0
        %495 = vmatprep.subr.mxu0 0.0
        %496 = vmatpush1.msra.mxu0 0.0
        %497 = vmatprep.subr.mxu0 0.0
        %498 = vmatpush1.msra.mxu0 0.0
        %499 = vmatprep.subr.mxu0 0.0
        %500 = vmatpush1.msra.mxu0 0.0
        %501 = vmatprep.subr.mxu0 0.0
        %502 = vmatpush1.msra.mxu0 0.0
        %503 = vmatprep.subr.mxu0 0.0
        %504 = vmatpush1.msra.mxu0 0.0
        %505 = vmatprep.subr.mxu0 0.0
        %506 = vmatpush1.msra.mxu0 0.0
        %507 = vmatprep.subr.mxu0 0.0
        %508 = vmatpush1.msra.mxu0 0.0
        %509 = vmatprep.subr.mxu0 0.0
        %510 = vmatpush1.msra.mxu0 0.0
        %511 = vmatprep.subr.mxu0 0.0
        %512 = vmatpush1.msra.mxu0 0.0
        %513 = vmatprep.subr.mxu0 0.0
        %514 = vmatpush1.msra.mxu0 0.0
        %515 = vmatprep.subr.mxu0 0.0
        %516 = vmatpush1.msra.mxu0 0.0
        %517 = vmatprep.subr.mxu0 0.0
        %518 = vmatpush1.msra.mxu0 0.0
        %519 = vmatprep.subr.mxu0 0.0
        %520 = vmatpush1.msra.mxu0 0.0
        %521 = vmatprep.subr.mxu0 0.0
        %522 = vmatpush1.msra.mxu0 0.0
        %523 = vmatprep.subr.mxu0 0.0
        %524 = vmatpush1.msra.mxu0 0.0
        %525 = vmatprep.subr.mxu0 0.0
        %526 = vmatpush1.msra.mxu0 0.0
        %527 = vmatprep.subr.mxu0 0.0
        %528 = vmatpush1.msra.mxu0 0.0
        %529 = vmatprep.subr.mxu0 0.0
        %530 = vmatpush1.msra.mxu0 0.0
        %531 = vmatprep.subr.mxu0 0.0
        %532 = vmatpush1.msra.mxu0 0.0
        %533 = vmatprep.subr.mxu0 0.0
        %534 = vmatpush1.msra.mxu0 0.0
        %535 = vmatprep.subr.mxu0 0.0
        %536 = vmatpush1.msra.mxu0 0.0
        %537 = vmatprep.subr.mxu0 0.0
        %538 = vmatpush1.msra.mxu0 0.0
        %539 = vmatprep.mubr.f32.mxu0 0.0
        %540 = vmatmul.mubr.f32.gmra.mrb[0].mxu0 %v473
        %v541 = vpop.f32.mrb[0].mxu0
        %v542 = vadd.f32 0.0, %v541
        %v543 = vpop.f32.mrb[0].mxu0
        %544 = vdwg.mxu0
        %v545 = vadd.f32 %v470, %v542
        %546 = vst [vmem:[%s360] sm:$0xff] %v545
        %s547 = sand.u32 %s186, 1
        %s548 = scalar_lea.sflag [#allocation4], %s547
        %s549 = sand.u32 %s186, 1
        %s550 = smul.addr %s549, 8
        %s551 = scalar_lea.vmem [#allocation11], %s550
        // Predicated region
        $region65: #{tpu_custom_call.1} parent=39 // pred_check
          %p552 = pneg %p196
        $region66: #{tpu_custom_call.1} parent=39 // pred_check_branch
          %554 = sbr.rel (%p552) target = $region68
        $region67: #{tpu_custom_call.1} parent=39 // pred_region
          %s556 = ssub.s32 128, 128
          %557 = vsyncadd %s548, %s556
          %s558 = sadd.s32 %s32, %s31
          %s559 = smul.addr %s558, 128
          %s560 = scalar_lea.hbm %s5, %s559
          %s562 = sshll.u32 %s551, 4
          %s563 = int_to_ptr.vmem [resolvable:$true] %s562
          %565 = dma.vmem_to_hbm [thread:$0]  %s563, 128, %s560, %s548
        $region68: #{tpu_custom_call.1} parent=39 // pred_fallthru
          _
      $region40: #{tpu_custom_call.1} parent=5 // pred_fallthru
        _
      %p566 = scmp.le.s32.totalorder 2, %s21
      // Predicated region
      $region69: #{tpu_custom_call.1} parent=5 // pred_check
        %p567 = pneg %p566
      $region70: #{tpu_custom_call.1} parent=5 // pred_check_branch
        %569 = sbr.rel (%p567) target = $region72
      $region71: #{tpu_custom_call.1} parent=5 // pred_region
        %s570 = ssub.s32 %s21, 2
        // Predicated region
        $region73: #{tpu_custom_call.1} parent=71 // pred_check
          %p571 = pneg %p202
        $region74: #{tpu_custom_call.1} parent=71 // pred_check_branch
          %573 = sbr.rel (%p571) target = $region76
        $region75: #{tpu_custom_call.1} parent=71 // pred_region
          %s574 = sand.u32 %s187, 1
          %s575 = scalar_lea.sflag [#allocation4], %s574
          %s576 = sand.u32 %s187, 1
          %s577 = smul.addr %s576, 8
          %s578 = scalar_lea.vmem [#allocation11], %s577
          %579 = dma.done %s575, 128
        $region76: #{tpu_custom_call.1} parent=71 // pred_fallthru
          _
      $region72: #{tpu_custom_call.1} parent=5 // pred_fallthru
        _
    $region6: #{tpu_custom_call.1} parent=1 // loop_footer
      %s25 = sadd.s32 1, %s21
    $region7: #{tpu_custom_call.1} parent=1 // loop_footer_branch
      %20 = sbr.rel target = $region3
    $region8: #{tpu_custom_call.1} parent=1 // loop_exit
      _
    %580 = vsyncpa [#allocation3], 1
    %s581 = scalar_lea.sflag [#allocation3], 1
    %582 = vsyncpa %s581, 1
    %583 = vsyncpa [#allocation6], 1
    %s584 = scalar_lea.sflag [#allocation6], 1
    %585 = vsyncpa %s584, 1
    %586 = vsyncpa [#allocation9], 1
    %587 = vsyncpa [#allocation4], 1
    %s588 = scalar_lea.sflag [#allocation4], 1
    %589 = vsyncpa %s588, 1

</llo_original>
